<compile_context>
chip_gen: v7x
topology: tpu7x:2x2x1
jax: 0.10.0
libtpu: 0.0.40
codegen_flags: <defaults>
</compile_context>

<pallas_src>
import jax
import jax.numpy as jnp
from jax.experimental import pallas as pl
from jax.experimental.pallas import tpu as pltpu


def classifier_kernel(x_ref, sel_ref, wct_ref, bc_ref, wlt_ref, bl_ref,
                      o_ref, acc_ref):
    s = pl.program_id(1)                       # spatial (reduction) grid step

    @pl.when(s == 0)
    def _init():
        acc_ref[...] = jnp.zeros_like(acc_ref)

    # Lane-dense elementwise accumulation of this (tb*C, ts) spatial slab:
    # pure VPU adds, f32 accumulation regardless of the transport dtype.
    acc_ref[...] += x_ref[...].astype(jnp.float32)

    @pl.when(s == pl.num_programs(1) - 1)
    def _epilogue():
        # One cross-lane reduce per row (rows = tb * C).
        row_sums = jnp.sum(acc_ref[...], axis=-1, keepdims=True)      # (tb*C, 1)
        # 1x1 conv on the pooled features, with no in-kernel reshape/transpose:
        #   h[b, f] = sum_c mean_pool[b, c] * Wc^T[c, f] + bc[f]
        # wct = tile(Wc^T / (H*W), tb) is (tb*C, F); sel[b, r] = 1 iff row r
        # belongs to batch b, so sel @ (row_sums * wct) == mean_pool @ Wc^T.
        h = jnp.dot(sel_ref[...], row_sums * wct_ref[...],
                    preferred_element_type=jnp.float32) + bc_ref[...]  # (tb, F)
        h = h * jnp.clip(h + 3.0, 0.0, 6.0) * (1.0 / 6.0)              # hswish
        out = jnp.dot(h, wlt_ref[...],
                      preferred_element_type=jnp.float32) + bl_ref[...]  # (tb, cls)
        o_ref[...] = out.astype(o_ref.dtype)


def _batch_tile(B, C):
    """Batches per row block. Multiples of 8 keep both the x row block (tb*C)
    and the output row block (tb) sublane-aligned; otherwise use the full
    batch (full-extent blocks are always legal)."""
    for tb in (64, 32, 16, 8):
        if B % tb == 0 and B // tb >= 2:
            return tb
    return B


def _spatial_tile(S):
    """Largest lane tile that is a multiple of 128, divides S, and leaves at
    least 2 grid steps (so the HBM read of x is double-buffered)."""
    if S % 128 != 0:
        return S                       # full-extent block (always legal)
    for ts in (2048, 1024, 512, 256, 128):
        if S % ts == 0 and S // ts >= 2:
            return ts
    return S


def classifier_forward(x_nchw, wc, bc, wl, bl):
    """x_nchw: (B, C, H, W); wc: (F, C) or (F, C, 1, 1); bc: (F,);
    wl: (cls, F); bl: (cls,)."""
    B, C, H, W = x_nchw.shape
    F_ = wc.shape[0]
    cls = wl.shape[0]
    S = H * W

    # ---- free wrapper-side layout plumbing --------------------------------
    # (B, C, H, W) -> (B*C, H*W): same memory order, sublane-dense rows.
    # Keep the incoming dtype (bf16 transport supported); accumulate f32 inside.
    x2 = x_nchw.reshape(B * C, S)

    tb = _batch_tile(B, C)             # batches per row block
    ts = _spatial_tile(S)              # lanes per spatial block
    tbr = tb * C                       # x rows per block

    # Conv weight: transpose to (C, F), fold in the 1/(H*W) mean scale, and
    # tile across the tb batches of a row block -> (tb*C, F).
    wc_t = (wc.reshape(F_, C).T / float(S)).astype(jnp.float32)      # (C, F)
    wct = jnp.tile(wc_t, (tb, 1))                                    # (tb*C, F)
    # Block-selection matrix: sel[b, r] = 1 iff row r belongs to batch b.
    sel = (jnp.arange(tbr)[None, :] // C
           == jnp.arange(tb)[:, None]).astype(jnp.float32)           # (tb, tb*C)

    bc2 = bc.reshape(1, F_).astype(jnp.float32)
    wlt = wl.T.astype(jnp.float32)                                   # (F, cls)
    bl2 = bl.reshape(1, cls).astype(jnp.float32)

    grid = (B // tb, S // ts)

    return pl.pallas_call(
        classifier_kernel,
        out_shape=jax.ShapeDtypeStruct((B, cls), jnp.float32),
        grid_spec=pltpu.PrefetchScalarGridSpec(
            num_scalar_prefetch=0,
            grid=grid,
            in_specs=[
                pl.BlockSpec((tbr, ts), lambda i, s: (i, s)),    # x (B*C, S)
                pl.BlockSpec((tb, tbr), lambda i, s: (0, 0)),    # sel
                pl.BlockSpec((tbr, F_), lambda i, s: (0, 0)),    # conv W (tiled, scaled)
                pl.BlockSpec((1, F_), lambda i, s: (0, 0)),      # conv bias
                pl.BlockSpec((F_, cls), lambda i, s: (0, 0)),    # linear W^T
                pl.BlockSpec((1, cls), lambda i, s: (0, 0)),     # linear bias
            ],
            out_specs=pl.BlockSpec((tb, cls), lambda i, s: (i, 0)),
            scratch_shapes=[pltpu.VMEM((tbr, ts), jnp.float32)],
        ),
        compiler_params=pltpu.CompilerParams(
            dimension_semantics=("parallel", "arbitrary"),
            vmem_limit_bytes=32 * 1024 * 1024,   # safe on v5e/v6e/v7x
        ),
    )(x2, sel, wct, bc2, wlt, bl2)


def reference_forward(x_nchw, wc, bc, wl, bl):
    pooled = jnp.mean(x_nchw, axis=(2, 3))                    # (B, C)
    h = pooled @ wc.T + bc                                    # (B, F)
    h = h * jnp.clip(h + 3.0, 0.0, 6.0) / 6.0                 # hswish
    return h @ wl.T + bl                                      # (B, cls)


if __name__ == "__main__":
    B, C, H, W = 2, 4, 16, 16       # batch, in_channel, spatial
    FILT, CLS = 32, 10              # filter, cls

    key = jax.random.PRNGKey(0)
    kx, kwc, kbc, kwl, kbl = jax.random.split(key, 5)

    x = jax.random.normal(kx, (B, C, H, W), dtype=jnp.float32)
    # Deterministic synthetic parameters (shapes from nn.Conv2d / nn.Linear).
    wc = 0.1 * jax.random.normal(kwc, (FILT, C), dtype=jnp.float32)   # Conv2d weight (F, C, 1, 1) squeezed
    bc = 0.1 * jax.random.normal(kbc, (FILT,), dtype=jnp.float32)
    wl = 0.1 * jax.random.normal(kwl, (CLS, FILT), dtype=jnp.float32) # Linear weight
    bl = 0.1 * jax.random.normal(kbl, (CLS,), dtype=jnp.float32)

    out = classifier_forward(x, wc, bc, wl, bl)
    out = jax.block_until_ready(out)

    ref = reference_forward(x, wc, bc, wl, bl)
    assert out.shape == (B, CLS)
    assert jnp.allclose(out, ref, atol=1e-5, rtol=1e-5), "mismatch vs reference"

    print("KERNEL_OK")
</pallas_src>

<mosaic_0001>
module attributes {stable_mosaic.version = 11 : i64} {
  func.func @classifier_kernel(%arg0: i32, %arg1: i32, %arg2: memref<8x128xf32, #tpu.memory_space<vmem>>, %arg3: memref<2x8xf32, #tpu.memory_space<vmem>>, %arg4: memref<8x32xf32, #tpu.memory_space<vmem>>, %arg5: memref<1x32xf32, #tpu.memory_space<vmem>>, %arg6: memref<32x10xf32, #tpu.memory_space<vmem>>, %arg7: memref<1x10xf32, #tpu.memory_space<vmem>>, %arg8: memref<2x10xf32, #tpu.memory_space<vmem>>, %arg9: memref<8x128xf32, #tpu.memory_space<vmem>>) attributes {dimension_semantics = [#tpu.dimension_semantics<parallel>, #tpu.dimension_semantics<arbitrary>], iteration_bounds = array<i64: 1, 2>, scalar_prefetch = 0 : i64, scratch_operands = 1 : i64, tpu.core_type = #tpu.core_type<tc>, window_params = [{transform_indices = @transform_0, window_bounds = array<i64: 8, 128>}, {pipeline_mode = #tpu.pipeline_mode<synchronous>, transform_indices = @transform_1, window_bounds = array<i64: 2, 8>}, {pipeline_mode = #tpu.pipeline_mode<synchronous>, transform_indices = @transform_2, window_bounds = array<i64: 8, 32>}, {pipeline_mode = #tpu.pipeline_mode<synchronous>, transform_indices = @transform_3, window_bounds = array<i64: 1, 32>}, {pipeline_mode = #tpu.pipeline_mode<synchronous>, transform_indices = @transform_4, window_bounds = array<i64: 32, 10>}, {pipeline_mode = #tpu.pipeline_mode<synchronous>, transform_indices = @transform_5, window_bounds = array<i64: 1, 10>}, {transform_indices = @transform_6, window_bounds = array<i64: 2, 10>}]} {
    %c0_i32 = arith.constant 0 : i32
    %0 = arith.cmpi eq, %arg1, %c0_i32 : i32
    %1 = arith.extui %0 : i1 to i32
    %c0_i32_0 = arith.constant 0 : i32
    %2 = arith.cmpi ne, %1, %c0_i32_0 : i32
    scf.if %2 {
      %cst = arith.constant 0.000000e+00 : f32
      %10 = vector.broadcast %cst : f32 to vector<8x128xf32>
      %c0_7 = arith.constant 0 : index
      %c0_8 = arith.constant 0 : index
      %11 = vector.load %arg9[%c0_7, %c0_8] : memref<8x128xf32, #tpu.memory_space<vmem>>, vector<8x128xf32>
      tpu.vector_store %arg9[%c0_7, %c0_8], %10 {strides = array<i32>} : memref<8x128xf32, #tpu.memory_space<vmem>>, vector<8x128xf32>,
    } else {
    }
    %c0 = arith.constant 0 : index
    %c0_1 = arith.constant 0 : index
    %3 = vector.load %arg9[%c0, %c0_1] : memref<8x128xf32, #tpu.memory_space<vmem>>, vector<8x128xf32>
    %c0_2 = arith.constant 0 : index
    %c0_3 = arith.constant 0 : index
    %4 = vector.load %arg2[%c0_2, %c0_3] : memref<8x128xf32, #tpu.memory_space<vmem>>, vector<8x128xf32>
    %5 = arith.addf %3, %4 : vector<8x128xf32>
    %c0_4 = arith.constant 0 : index
    %c0_5 = arith.constant 0 : index
    %6 = vector.load %arg9[%c0_4, %c0_5] : memref<8x128xf32, #tpu.memory_space<vmem>>, vector<8x128xf32>
    tpu.vector_store %arg9[%c0_4, %c0_5], %5 {strides = array<i32>} : memref<8x128xf32, #tpu.memory_space<vmem>>, vector<8x128xf32>,
    %c1_i32 = arith.constant 1 : i32
    %7 = arith.cmpi eq, %arg1, %c1_i32 : i32
    %8 = arith.extui %7 : i1 to i32
    %c0_i32_6 = arith.constant 0 : i32
    %9 = arith.cmpi ne, %8, %c0_i32_6 : i32
    scf.if %9 {
      %c0_7 = arith.constant 0 : index
      %c0_8 = arith.constant 0 : index
      %10 = vector.load %arg9[%c0_7, %c0_8] : memref<8x128xf32, #tpu.memory_space<vmem>>, vector<8x128xf32>
      %cst = arith.constant dense<0.000000e+00> : vector<8xf32>
      %11 = vector.multi_reduction <add>, %10, %cst [1] : vector<8x128xf32> to vector<8xf32>
      %12 = vector.shape_cast %11 : vector<8xf32> to vector<8x1xf32>
      %c0_9 = arith.constant 0 : index
      %c0_10 = arith.constant 0 : index
      %13 = vector.load %arg3[%c0_9, %c0_10] : memref<2x8xf32, #tpu.memory_space<vmem>>, vector<2x8xf32>
      %c0_11 = arith.constant 0 : index
      %c0_12 = arith.constant 0 : index
      %14 = vector.load %arg4[%c0_11, %c0_12] : memref<8x32xf32, #tpu.memory_space<vmem>>, vector<8x32xf32>
      %15 = vector.broadcast %12 : vector<8x1xf32> to vector<8x32xf32>
      %16 = arith.mulf %15, %14 : vector<8x32xf32>
      %cst_13 = arith.constant dense<0.000000e+00> : vector<2x32xf32>
      %17 = tpu.matmul %13, %16, %cst_13 {dimension_numbers = #tpu.dot_dimension_numbers<[1], [0], [0], [1], [0, 0, 1, 1], [], []>} : vector<2x8xf32>, vector<8x32xf32>, vector<2x32xf32> -> vector<2x32xf32>
      %c0_14 = arith.constant 0 : index
      %c0_15 = arith.constant 0 : index
      %18 = vector.load %arg5[%c0_14, %c0_15] : memref<1x32xf32, #tpu.memory_space<vmem>>, vector<1x32xf32>
      %19 = vector.broadcast %18 : vector<1x32xf32> to vector<2x32xf32>
      %20 = arith.addf %17, %19 : vector<2x32xf32>
      %cst_16 = arith.constant 3.000000e+00 : f32
      %21 = vector.broadcast %cst_16 : f32 to vector<2x32xf32>
      %22 = arith.addf %20, %21 : vector<2x32xf32>
      %cst_17 = arith.constant 0.000000e+00 : f32
      %cst_18 = arith.constant 6.000000e+00 : f32
      %23 = vector.broadcast %cst_17 : f32 to vector<2x32xf32>
      %24 = arith.maximumf %23, %22 : vector<2x32xf32>
      %25 = vector.broadcast %cst_18 : f32 to vector<2x32xf32>
      %26 = arith.minimumf %25, %24 : vector<2x32xf32>
      %27 = arith.mulf %20, %26 : vector<2x32xf32>
      %cst_19 = arith.constant 0.166666672 : f32
      %28 = vector.broadcast %cst_19 : f32 to vector<2x32xf32>
      %29 = arith.mulf %27, %28 : vector<2x32xf32>
      %c0_20 = arith.constant 0 : index
      %c0_21 = arith.constant 0 : index
      %30 = vector.load %arg6[%c0_20, %c0_21] : memref<32x10xf32, #tpu.memory_space<vmem>>, vector<32x10xf32>
      %cst_22 = arith.constant dense<0.000000e+00> : vector<2x10xf32>
      %31 = tpu.matmul %29, %30, %cst_22 {dimension_numbers = #tpu.dot_dimension_numbers<[1], [0], [0], [1], [0, 0, 1, 1], [], []>} : vector<2x32xf32>, vector<32x10xf32>, vector<2x10xf32> -> vector<2x10xf32>
      %c0_23 = arith.constant 0 : index
      %c0_24 = arith.constant 0 : index
      %32 = vector.load %arg7[%c0_23, %c0_24] : memref<1x10xf32, #tpu.memory_space<vmem>>, vector<1x10xf32>
      %33 = vector.broadcast %32 : vector<1x10xf32> to vector<2x10xf32>
      %34 = arith.addf %31, %33 : vector<2x10xf32>
      %c0_25 = arith.constant 0 : index
      %c0_26 = arith.constant 0 : index
      %35 = vector.load %arg8[%c0_25, %c0_26] : memref<2x10xf32, #tpu.memory_space<vmem>>, vector<2x10xf32>
      tpu.vector_store %arg8[%c0_25, %c0_26], %34 {strides = array<i32>} : memref<2x10xf32, #tpu.memory_space<vmem>>, vector<2x10xf32>,
    } else {
    }
    return
  }
  func.func @transform_0(%arg0: i32, %arg1: i32) -> (i32, i32) {
    %c0_i32 = arith.constant 0 : i32
    return %arg0, %arg1 : i32, i32
  }
  func.func @transform_1(%arg0: i32, %arg1: i32) -> (i32, i32) {
    %c0_i32 = arith.constant 0 : i32
    %c0_i32_0 = arith.constant 0 : i32
    %c0_i32_1 = arith.constant 0 : i32
    return %c0_i32, %c0_i32_0 : i32, i32
  }
  func.func @transform_2(%arg0: i32, %arg1: i32) -> (i32, i32) {
    %c0_i32 = arith.constant 0 : i32
    %c0_i32_0 = arith.constant 0 : i32
    %c0_i32_1 = arith.constant 0 : i32
    return %c0_i32, %c0_i32_0 : i32, i32
  }
  func.func @transform_3(%arg0: i32, %arg1: i32) -> (i32, i32) {
    %c0_i32 = arith.constant 0 : i32
    %c0_i32_0 = arith.constant 0 : i32
    %c0_i32_1 = arith.constant 0 : i32
    return %c0_i32, %c0_i32_0 : i32, i32
  }
  func.func @transform_4(%arg0: i32, %arg1: i32) -> (i32, i32) {
    %c0_i32 = arith.constant 0 : i32
    %c0_i32_0 = arith.constant 0 : i32
    %c0_i32_1 = arith.constant 0 : i32
    return %c0_i32, %c0_i32_0 : i32, i32
  }
  func.func @transform_5(%arg0: i32, %arg1: i32) -> (i32, i32) {
    %c0_i32 = arith.constant 0 : i32
    %c0_i32_0 = arith.constant 0 : i32
    %c0_i32_1 = arith.constant 0 : i32
    return %c0_i32, %c0_i32_0 : i32, i32
  }
  func.func @transform_6(%arg0: i32, %arg1: i32) -> (i32, i32) {
    %c0_i32 = arith.constant 0 : i32
    %c0_i32_0 = arith.constant 0 : i32
    return %arg0, %c0_i32 : i32, i32
  }
}

</mosaic_0001>

<llo_original>
// kernel: tpu_custom_call.1
$region0: #{tpu_custom_call.1}
  #allocation0 [shape = 'u32[]', space=smem, size = 0x4, offset = 0x4, fixed_abs, tag = 'smem constant byte address 0x4 - core index']
  #allocation1 [shape = 'u32[144,128]{1,0:T(1,128)}', space=vmem, size = 0x12000, scoped, tag = 'internal scratch']
  #allocation2 [shape = 'f32[8,128]{1,0:T(8,128)}', space=vmem, size = 0x1000, scoped, tag = 'scratch operand']
  %s0 = inlined_call_operand.vmem [shape: f32[8,256], index: 0, kind: input, shape index: {}]
  %s1 = inlined_call_operand.vmem [shape: f32[2,8], index: 1, kind: input, shape index: {}]
  %s2 = inlined_call_operand.vmem [shape: f32[8,32], index: 2, kind: input, shape index: {}]
  %s3 = inlined_call_operand.vmem [shape: f32[1,32], index: 3, kind: input, shape index: {}]
  %s4 = inlined_call_operand.vmem [shape: f32[32,10], index: 4, kind: input, shape index: {}]
  %s5 = inlined_call_operand.vmem [shape: f32[1,10], index: 5, kind: input, shape index: {}]
  %s6 = inlined_call_operand.hbm [shape: f32[2,10], index: 6, kind: output, shape index: {}]
  %s7 = sld [smem:[#allocation0]]
  $region65: #{tpu_custom_call.1} parent=0
    _
  %s9 = ssub.s32 1, %s7
  %s10 = scalar_select 0, %s9, %s7
  $region1: #{tpu_custom_call.1} parent=0
    #allocation3 [shape = 'u8[1024]{0}', space=vmem, size = 0x400, scoped, tag = 'output window, operand 0, single buffered']
    #allocation4 [shape = 's32[2]{0}', space=sflag, size = 0x8, scoped, tag = 'scoped memory for tpu_custom_call.1']
    %11 = vsyncpa [#allocation4], 0
    loop: start=0, step=1, limit=4
    $region2: #{tpu_custom_call.1} parent=1 // loop_pre_header
      _
    $region3: #{tpu_custom_call.1} parent=1 // loop_header
      %s13 = sphi 0, %s17
      %p14 = scmp.ge.s32.totalorder %s13, 4
      %s20 = sphi 0, %s32
      %s21 = sphi 0, %s28
      %s22 = sphi 0, %s20
      %s23 = sphi 0, %s21
      %s24 = sphi 0, %s22
      %s25 = sphi 0, %s23
      %s37 = sphi 0, %s39
      %s40 = sphi 0, %s37
      %s41 = sphi 0, %s40
      %s57 = sphi 0, %s41
      %s61 = sphi 0, %s61
      %s63 = sphi 0, %s61
      %s64 = sphi 0, %s63
      %s78 = sphi 0, %s64
      %s82 = sphi 0, %s82
      %s84 = sphi 0, %s82
      %s85 = sphi 0, %s84
      %s99 = sphi 0, %s85
      %s103 = sphi 0, %s103
      %s105 = sphi 0, %s103
      %s106 = sphi 0, %s105
      %s120 = sphi 0, %s106
      %s124 = sphi 0, %s124
      %s126 = sphi 0, %s124
      %s127 = sphi 0, %s126
      %s141 = sphi 0, %s127
      %s145 = sphi 0, %s145
      %s147 = sphi 0, %s145
      %s148 = sphi 0, %s147
      %s162 = sphi 0, %s148
      %s168 = sphi 0, %s170
      %s171 = sphi 0, %s168
      %s172 = sphi 0, %s171
      %s188 = sphi 0, %s172
    $region4: #{tpu_custom_call.1} parent=1 // loop_header_branch
      %16 = sbr.rel (%p14) target = $region8
    $region5: #{tpu_custom_call.1} parent=1 // loop_body
      %s18 = ssub.s32 %s13, 1
      %s19 = ssub.s32 %s13, 2
      %s26 = sadd.s32 1, %s21
      %p27 = scmp.ge.s32.totalorder %s26, 2
      %s28 = scalar_select %p27, 0, %s26
      %s29 = sadd.s32 1, %s20
      %s30 = scalar_select %p27, %s29, %s20
      %p31 = scmp.ge.s32.totalorder %s30, 1
      %s32 = scalar_select %p31, 0, %s30
      %s33 = ssub.s32 %s20, %s32
      %s34 = ssub.s32 %s21, %s28
      %s35 = sor.u32 %s33, %s34
      %p36 = scmp.eq.s32.totalorder %s35, 0
      %s38 = sadd.s32 %s37, 1
      %s39 = scalar_select %p36, %s37, %s38
      %p42 = pneg %p36
      %p43 = scmp.eq.s32.totalorder %s13, 1
      %p44 = por %p42, %p43
      %p45 = scmp.ne.s32.totalorder %s37, %s40
      %p46 = scmp.eq.s32.totalorder %s13, 0
      %p47 = por %p45, %p46
      %p48 = scmp.ne.s32.totalorder %s37, %s40
      %p49 = scmp.eq.s32.totalorder %s18, 1
      %p50 = por %p48, %p49
      %p51 = scmp.ne.s32.totalorder %s40, %s41
      %p52 = scmp.eq.s32.totalorder %s18, 0
      %p53 = por %p51, %p52
      %p54 = scmp.ne.s32.totalorder %s40, %s41
      %p55 = scmp.eq.s32.totalorder %s19, 1
      %p56 = por %p54, %p55
      %p58 = scmp.ne.s32.totalorder %s41, %s57
      %p59 = scmp.eq.s32.totalorder %s19, 0
      %p60 = por %p58, %p59
      %s62 = sadd.s32 %s61, 1
      %p65 = scmp.eq.s32.totalorder %s13, 1
      %p66 = scmp.ne.s32.totalorder %s61, %s63
      %p67 = scmp.eq.s32.totalorder %s13, 0
      %p68 = por %p66, %p67
      %p69 = scmp.ne.s32.totalorder %s61, %s63
      %p70 = scmp.eq.s32.totalorder %s18, 1
      %p71 = por %p69, %p70
      %p72 = scmp.ne.s32.totalorder %s63, %s64
      %p73 = scmp.eq.s32.totalorder %s18, 0
      %p74 = por %p72, %p73
      %p75 = scmp.ne.s32.totalorder %s63, %s64
      %p76 = scmp.eq.s32.totalorder %s19, 1
      %p77 = por %p75, %p76
      %p79 = scmp.ne.s32.totalorder %s64, %s78
      %p80 = scmp.eq.s32.totalorder %s19, 0
      %p81 = por %p79, %p80
      %s83 = sadd.s32 %s82, 1
      %p86 = scmp.eq.s32.totalorder %s13, 1
      %p87 = scmp.ne.s32.totalorder %s82, %s84
      %p88 = scmp.eq.s32.totalorder %s13, 0
      %p89 = por %p87, %p88
      %p90 = scmp.ne.s32.totalorder %s82, %s84
      %p91 = scmp.eq.s32.totalorder %s18, 1
      %p92 = por %p90, %p91
      %p93 = scmp.ne.s32.totalorder %s84, %s85
      %p94 = scmp.eq.s32.totalorder %s18, 0
      %p95 = por %p93, %p94
      %p96 = scmp.ne.s32.totalorder %s84, %s85
      %p97 = scmp.eq.s32.totalorder %s19, 1
      %p98 = por %p96, %p97
      %p100 = scmp.ne.s32.totalorder %s85, %s99
      %p101 = scmp.eq.s32.totalorder %s19, 0
      %p102 = por %p100, %p101
      %s104 = sadd.s32 %s103, 1
      %p107 = scmp.eq.s32.totalorder %s13, 1
      %p108 = scmp.ne.s32.totalorder %s103, %s105
      %p109 = scmp.eq.s32.totalorder %s13, 0
      %p110 = por %p108, %p109
      %p111 = scmp.ne.s32.totalorder %s103, %s105
      %p112 = scmp.eq.s32.totalorder %s18, 1
      %p113 = por %p111, %p112
      %p114 = scmp.ne.s32.totalorder %s105, %s106
      %p115 = scmp.eq.s32.totalorder %s18, 0
      %p116 = por %p114, %p115
      %p117 = scmp.ne.s32.totalorder %s105, %s106
      %p118 = scmp.eq.s32.totalorder %s19, 1
      %p119 = por %p117, %p118
      %p121 = scmp.ne.s32.totalorder %s106, %s120
      %p122 = scmp.eq.s32.totalorder %s19, 0
      %p123 = por %p121, %p122
      %s125 = sadd.s32 %s124, 1
      %p128 = scmp.eq.s32.totalorder %s13, 1
      %p129 = scmp.ne.s32.totalorder %s124, %s126
      %p130 = scmp.eq.s32.totalorder %s13, 0
      %p131 = por %p129, %p130
      %p132 = scmp.ne.s32.totalorder %s124, %s126
      %p133 = scmp.eq.s32.totalorder %s18, 1
      %p134 = por %p132, %p133
      %p135 = scmp.ne.s32.totalorder %s126, %s127
      %p136 = scmp.eq.s32.totalorder %s18, 0
      %p137 = por %p135, %p136
      %p138 = scmp.ne.s32.totalorder %s126, %s127
      %p139 = scmp.eq.s32.totalorder %s19, 1
      %p140 = por %p138, %p139
      %p142 = scmp.ne.s32.totalorder %s127, %s141
      %p143 = scmp.eq.s32.totalorder %s19, 0
      %p144 = por %p142, %p143
      %s146 = sadd.s32 %s145, 1
      %p149 = scmp.eq.s32.totalorder %s13, 1
      %p150 = scmp.ne.s32.totalorder %s145, %s147
      %p151 = scmp.eq.s32.totalorder %s13, 0
      %p152 = por %p150, %p151
      %p153 = scmp.ne.s32.totalorder %s145, %s147
      %p154 = scmp.eq.s32.totalorder %s18, 1
      %p155 = por %p153, %p154
      %p156 = scmp.ne.s32.totalorder %s147, %s148
      %p157 = scmp.eq.s32.totalorder %s18, 0
      %p158 = por %p156, %p157
      %p159 = scmp.ne.s32.totalorder %s147, %s148
      %p160 = scmp.eq.s32.totalorder %s19, 1
      %p161 = por %p159, %p160
      %p163 = scmp.ne.s32.totalorder %s148, %s162
      %p164 = scmp.eq.s32.totalorder %s19, 0
      %p165 = por %p163, %p164
      %s166 = ssub.s32 %s20, %s32
      %p167 = scmp.eq.s32.totalorder %s166, 0
      %s169 = sadd.s32 %s168, 1
      %s170 = scalar_select %p167, %s168, %s169
      %p173 = pneg %p167
      %p174 = scmp.eq.s32.totalorder %s13, 1
      %p175 = por %p173, %p174
      %p176 = scmp.ne.s32.totalorder %s168, %s171
      %p177 = scmp.eq.s32.totalorder %s13, 0
      %p178 = por %p176, %p177
      %p179 = scmp.ne.s32.totalorder %s168, %s171
      %p180 = scmp.eq.s32.totalorder %s18, 1
      %p181 = por %p179, %p180
      %p182 = scmp.ne.s32.totalorder %s171, %s172
      %p183 = scmp.eq.s32.totalorder %s18, 0
      %p184 = por %p182, %p183
      %p185 = scmp.ne.s32.totalorder %s171, %s172
      %p186 = scmp.eq.s32.totalorder %s19, 1
      %p187 = por %p185, %p186
      %p189 = scmp.ne.s32.totalorder %s172, %s188
      %p190 = scmp.eq.s32.totalorder %s19, 0
      %p191 = por %p189, %p190
      %p192 = scmp.le.s32.totalorder 1, %s13
      %p193 = scmp.lt.s32.totalorder %s13, 3
      %p194 = pnand %p192, %p193
      %p195 = pneg %p194
      // Predicated region
      $region9: #{tpu_custom_call.1} parent=5 // pred_check
        _
      $region10: #{tpu_custom_call.1} parent=5 // pred_check_branch
        %197 = sbr.rel (%p194) target = $region12
      $region11: #{tpu_custom_call.1} parent=5 // pred_region
        %s198 = ssub.s32 %s13, 1
        // Predicated region
        $region13: #{tpu_custom_call.1} parent=11 // pred_check
          %p199 = pneg %p74
        $region14: #{tpu_custom_call.1} parent=11 // pred_check_branch
          %201 = sbr.rel (%p199) target = $region16
        $region15: #{tpu_custom_call.1} parent=11 // pred_region
          _
        $region16: #{tpu_custom_call.1} parent=11 // pred_fallthru
          _
        // Predicated region
        $region17: #{tpu_custom_call.1} parent=11 // pred_check
          %p202 = pneg %p95
        $region18: #{tpu_custom_call.1} parent=11 // pred_check_branch
          %204 = sbr.rel (%p202) target = $region20
        $region19: #{tpu_custom_call.1} parent=11 // pred_region
          _
        $region20: #{tpu_custom_call.1} parent=11 // pred_fallthru
          _
        // Predicated region
        $region21: #{tpu_custom_call.1} parent=11 // pred_check
          %p205 = pneg %p116
        $region22: #{tpu_custom_call.1} parent=11 // pred_check_branch
          %207 = sbr.rel (%p205) target = $region24
        $region23: #{tpu_custom_call.1} parent=11 // pred_region
          _
        $region24: #{tpu_custom_call.1} parent=11 // pred_fallthru
          _
        // Predicated region
        $region25: #{tpu_custom_call.1} parent=11 // pred_check
          %p208 = pneg %p137
        $region26: #{tpu_custom_call.1} parent=11 // pred_check_branch
          %210 = sbr.rel (%p208) target = $region28
        $region27: #{tpu_custom_call.1} parent=11 // pred_region
          _
        $region28: #{tpu_custom_call.1} parent=11 // pred_fallthru
          _
        // Predicated region
        $region29: #{tpu_custom_call.1} parent=11 // pred_check
          %p211 = pneg %p158
        $region30: #{tpu_custom_call.1} parent=11 // pred_check_branch
          %213 = sbr.rel (%p211) target = $region32
        $region31: #{tpu_custom_call.1} parent=11 // pred_region
          _
        $region32: #{tpu_custom_call.1} parent=11 // pred_fallthru
          _
      $region12: #{tpu_custom_call.1} parent=5 // pred_fallthru
        _
      %p214 = scmp.lt.s32.totalorder %s13, 2
      // Predicated region
      $region33: #{tpu_custom_call.1} parent=5 // pred_check
        %p215 = pneg %p214
      $region34: #{tpu_custom_call.1} parent=5 // pred_check_branch
        %217 = sbr.rel (%p215) target = $region36
      $region35: #{tpu_custom_call.1} parent=5 // pred_region
        // Predicated region
        $region37: #{tpu_custom_call.1} parent=35 // pred_check
          %p218 = pneg %p47
        $region38: #{tpu_custom_call.1} parent=35 // pred_check_branch
          %220 = sbr.rel (%p218) target = $region40
        $region39: #{tpu_custom_call.1} parent=35 // pred_region
          %p221 = scmp.lt.s32.totalorder %s20, 0
          %s222 = scalar_select %p221, %s20, 0
          %p223 = scmp.lt.s32.totalorder %s21, 1
          %s224 = scalar_select %p223, %s21, 1
          %s225 = smul.addr %s222, 2
          %s226 = sadd.s32 %s224, %s225
          %s227 = smul.addr %s226, 8
          %s228 = scalar_lea.vmem %s0, %s227
        $region40: #{tpu_custom_call.1} parent=35 // pred_fallthru
          _
      $region36: #{tpu_custom_call.1} parent=5 // pred_fallthru
        _
      %p229 = scmp.le.s32.totalorder 1, %s13
      %p230 = scmp.lt.s32.totalorder %s13, 3
      %p231 = pnand %p229, %p230
      %p232 = pneg %p231
      // Predicated region
      $region41: #{tpu_custom_call.1} parent=5 // pred_check
        _
      $region42: #{tpu_custom_call.1} parent=5 // pred_check_branch
        %234 = sbr.rel (%p231) target = $region44
      $region43: #{tpu_custom_call.1} parent=5 // pred_region
        %s235 = ssub.s32 %s13, 1
        %p236 = scmp.lt.s32.totalorder %s22, 0
        %s237 = scalar_select %p236, %s22, 0
        %p238 = scmp.lt.s32.totalorder %s23, 1
        %s239 = scalar_select %p238, %s23, 1
        %s240 = smul.addr %s237, 2
        %s241 = sadd.s32 %s239, %s240
        %s242 = smul.addr %s241, 8
        %s243 = scalar_lea.vmem %s0, %s242
        %p244 = pneg %p53
        %p245 = pneg %p50
        %p246 = pneg %p74
        %p247 = pneg %p71
        %p248 = pneg %p95
        %p249 = pneg %p92
        %p250 = pneg %p116
        %p251 = pneg %p113
        %p252 = pneg %p137
        %p253 = pneg %p134
        %p254 = pneg %p158
        %p255 = pneg %p155
        %p256 = pneg %p184
        %p257 = pneg %p181
        %p258 = scmp.lt.s32.totalorder %s22, 0
        %s259 = scalar_select %p258, %s22, 0
        %p260 = scmp.lt.s32.totalorder %s23, 1
        %s261 = scalar_select %p260, %s23, 1
        %s262 = smul.addr %s259, 2
        %s263 = sadd.s32 %s261, %s262
        %s264 = smul.addr %s263, 8
        %s265 = scalar_lea.vmem %s0, %s264
        %p266 = scmp.eq.s32.totalorder %s23, 0
        // Predicated region
        $region45: #{tpu_custom_call.1} parent=43 // pred_check
          %p267 = pneg %p266
        $region46: #{tpu_custom_call.1} parent=43 // pred_check_branch
          %269 = sbr.rel (%p267) target = $region48
        $region47: #{tpu_custom_call.1} parent=43 // pred_region
          %270 = vst [vmem:[#allocation2] sm:$0xff] 0.0
        $region48: #{tpu_custom_call.1} parent=43 // pred_fallthru
          _
        %v271 = vld [vmem:[#allocation2] sm:$0xff]
        %v272 = vld [vmem:[%s265] sm:$0xff]
        %v273 = vadd.f32 %v271, %v272
        %274 = vst [vmem:[#allocation2] sm:$0xff] %v273
        %p275 = scmp.eq.s32.totalorder %s23, 1
        // Predicated region
        $region49: #{tpu_custom_call.1} parent=43 // pred_check
          %p276 = pneg %p275
        $region50: #{tpu_custom_call.1} parent=43 // pred_check_branch
          %278 = sbr.rel (%p276) target = $region52
        $region51: #{tpu_custom_call.1} parent=43 // pred_region
          %v279 = vld [vmem:[#allocation2] sm:$0xff]
          %280 = vadd.xlane.f32.xlu0 %v279
          %v281 = vpop.xlane.xlu0 %280
          %v282 = vld [vmem:[%s1] sm:$0x3]
          %v283 = vld [vmem:[%s2] sm:$0xff]
          %v284 = vmul.f32 %v281, %v283
          %v285 = vld [vmem:[%s3] sm:$0x1]
          %v287 = vlaneseq
          %v288 = vshrl.u32 %v287, 7
          %v289 = vsub.s32 0, %v288
          %v290 = vrot.slane %v285, %v289
          %vm292 = vcmask 64512
          %v294 = vsel %vm292, %v282, 0
          %296 = vmatprep.subr.mxu0 0.0
          %297 = vmatpush1.msra.mxu0 %v284
          %298 = vmatprep.subr.mxu0 0.0
          %299 = vmatpush1.msra.mxu0 0.0
          %300 = vmatprep.subr.mxu0 0.0
          %301 = vmatpush1.msra.mxu0 0.0
          %302 = vmatprep.subr.mxu0 0.0
          %303 = vmatpush1.msra.mxu0 0.0
          %304 = vmatprep.subr.mxu0 0.0
          %305 = vmatpush1.msra.mxu0 0.0
          %306 = vmatprep.subr.mxu0 0.0
          %307 = vmatpush1.msra.mxu0 0.0
          %308 = vmatprep.subr.mxu0 0.0
          %309 = vmatpush1.msra.mxu0 0.0
          %310 = vmatprep.subr.mxu0 0.0
          %311 = vmatpush1.msra.mxu0 0.0
          %312 = vmatprep.subr.mxu0 0.0
          %313 = vmatpush1.msra.mxu0 0.0
          %314 = vmatprep.subr.mxu0 0.0
          %315 = vmatpush1.msra.mxu0 0.0
          %316 = vmatprep.subr.mxu0 0.0
          %317 = vmatpush1.msra.mxu0 0.0
          %318 = vmatprep.subr.mxu0 0.0
          %319 = vmatpush1.msra.mxu0 0.0
          %320 = vmatprep.subr.mxu0 0.0
          %321 = vmatpush1.msra.mxu0 0.0
          %322 = vmatprep.subr.mxu0 0.0
          %323 = vmatpush1.msra.mxu0 0.0
          %324 = vmatprep.subr.mxu0 0.0
          %325 = vmatpush1.msra.mxu0 0.0
          %326 = vmatprep.subr.mxu0 0.0
          %327 = vmatpush1.msra.mxu0 0.0
          %328 = vmatprep.subr.mxu0 0.0
          %329 = vmatpush1.msra.mxu0 0.0
          %330 = vmatprep.subr.mxu0 0.0
          %331 = vmatpush1.msra.mxu0 0.0
          %332 = vmatprep.subr.mxu0 0.0
          %333 = vmatpush1.msra.mxu0 0.0
          %334 = vmatprep.subr.mxu0 0.0
          %335 = vmatpush1.msra.mxu0 0.0
          %336 = vmatprep.subr.mxu0 0.0
          %337 = vmatpush1.msra.mxu0 0.0
          %338 = vmatprep.subr.mxu0 0.0
          %339 = vmatpush1.msra.mxu0 0.0
          %340 = vmatprep.subr.mxu0 0.0
          %341 = vmatpush1.msra.mxu0 0.0
          %342 = vmatprep.subr.mxu0 0.0
          %343 = vmatpush1.msra.mxu0 0.0
          %344 = vmatprep.subr.mxu0 0.0
          %345 = vmatpush1.msra.mxu0 0.0
          %346 = vmatprep.subr.mxu0 0.0
          %347 = vmatpush1.msra.mxu0 0.0
          %348 = vmatprep.subr.mxu0 0.0
          %349 = vmatpush1.msra.mxu0 0.0
          %350 = vmatprep.subr.mxu0 0.0
          %351 = vmatpush1.msra.mxu0 0.0
          %352 = vmatprep.subr.mxu0 0.0
          %353 = vmatpush1.msra.mxu0 0.0
          %354 = vmatprep.subr.mxu0 0.0
          %355 = vmatpush1.msra.mxu0 0.0
          %356 = vmatprep.subr.mxu0 0.0
          %357 = vmatpush1.msra.mxu0 0.0
          %358 = vmatprep.subr.mxu0 0.0
          %359 = vmatpush1.msra.mxu0 0.0
          %360 = vmatprep.mubr.f32.mxu0 0.0
          %361 = vmatmul.mubr.f32.gmra.mrb[0].mxu0 %v294
          %v362 = vpop.f32.mrb[0].mxu0
          %v363 = vadd.f32 %v290, %v362
          %v364 = vpop.f32.mrb[0].mxu0
          %365 = vdwg.mxu0
          %v366 = vadd.f32 %v363, 3.0
          %v367 = vmax.f32 %v366, 0.0
          %v368 = vmin.f32 %v367, 6.0
          %v369 = vmul.f32 %v363, %v368
          %v370 = vmul.f32 %v369, 0.16666667
          %v371 = vld [vmem:[%s4] sm:$0xff]
          %v372 = vld [vmem:[%s4 + $0x8] sm:$0xff]
          %v373 = vld [vmem:[%s4 + $0x10] sm:$0xff]
          %v374 = vld [vmem:[%s4 + $0x18] sm:$0xff]
          %v375 = vld [vmem:[%s5] sm:$0x1]
          %v377 = vlaneseq
          %v378 = vshrl.u32 %v377, 7
          %v379 = vsub.s32 0, %v378
          %v380 = vrot.slane %v375, %v379
          %vm382 = vcmask 261120
          %v384 = vsel %vm382, %v370, 0
          %386 = vmatprep.subr.mxu0 0.0
          %387 = vmatpush1.msra.mxu0 %v371
          %388 = vmatprep.subr.mxu0 0.0
          %389 = vmatpush1.msra.mxu0 %v372
          %390 = vmatprep.subr.mxu0 0.0
          %391 = vmatpush1.msra.mxu0 %v373
          %392 = vmatprep.subr.mxu0 0.0
          %393 = vmatpush1.msra.mxu0 %v374
          %394 = vmatprep.subr.mxu0 0.0
          %395 = vmatpush1.msra.mxu0 0.0
          %396 = vmatprep.subr.mxu0 0.0
          %397 = vmatpush1.msra.mxu0 0.0
          %398 = vmatprep.subr.mxu0 0.0
          %399 = vmatpush1.msra.mxu0 0.0
          %400 = vmatprep.subr.mxu0 0.0
          %401 = vmatpush1.msra.mxu0 0.0
          %402 = vmatprep.subr.mxu0 0.0
          %403 = vmatpush1.msra.mxu0 0.0
          %404 = vmatprep.subr.mxu0 0.0
          %405 = vmatpush1.msra.mxu0 0.0
          %406 = vmatprep.subr.mxu0 0.0
          %407 = vmatpush1.msra.mxu0 0.0
          %408 = vmatprep.subr.mxu0 0.0
          %409 = vmatpush1.msra.mxu0 0.0
          %410 = vmatprep.subr.mxu0 0.0
          %411 = vmatpush1.msra.mxu0 0.0
          %412 = vmatprep.subr.mxu0 0.0
          %413 = vmatpush1.msra.mxu0 0.0
          %414 = vmatprep.subr.mxu0 0.0
          %415 = vmatpush1.msra.mxu0 0.0
          %416 = vmatprep.subr.mxu0 0.0
          %417 = vmatpush1.msra.mxu0 0.0
          %418 = vmatprep.subr.mxu0 0.0
          %419 = vmatpush1.msra.mxu0 0.0
          %420 = vmatprep.subr.mxu0 0.0
          %421 = vmatpush1.msra.mxu0 0.0
          %422 = vmatprep.subr.mxu0 0.0
          %423 = vmatpush1.msra.mxu0 0.0
          %424 = vmatprep.subr.mxu0 0.0
          %425 = vmatpush1.msra.mxu0 0.0
          %426 = vmatprep.subr.mxu0 0.0
          %427 = vmatpush1.msra.mxu0 0.0
          %428 = vmatprep.subr.mxu0 0.0
          %429 = vmatpush1.msra.mxu0 0.0
          %430 = vmatprep.subr.mxu0 0.0
          %431 = vmatpush1.msra.mxu0 0.0
          %432 = vmatprep.subr.mxu0 0.0
          %433 = vmatpush1.msra.mxu0 0.0
          %434 = vmatprep.subr.mxu0 0.0
          %435 = vmatpush1.msra.mxu0 0.0
          %436 = vmatprep.subr.mxu0 0.0
          %437 = vmatpush1.msra.mxu0 0.0
          %438 = vmatprep.subr.mxu0 0.0
          %439 = vmatpush1.msra.mxu0 0.0
          %440 = vmatprep.subr.mxu0 0.0
          %441 = vmatpush1.msra.mxu0 0.0
          %442 = vmatprep.subr.mxu0 0.0
          %443 = vmatpush1.msra.mxu0 0.0
          %444 = vmatprep.subr.mxu0 0.0
          %445 = vmatpush1.msra.mxu0 0.0
          %446 = vmatprep.subr.mxu0 0.0
          %447 = vmatpush1.msra.mxu0 0.0
          %448 = vmatprep.subr.mxu0 0.0
          %449 = vmatpush1.msra.mxu0 0.0
          %450 = vmatprep.mubr.f32.mxu0 0.0
          %451 = vmatmul.mubr.f32.gmra.mrb[0].mxu0 %v384
          %v452 = vpop.f32.mrb[0].mxu0
          %v453 = vadd.f32 %v380, %v452
          %v454 = vpop.f32.mrb[0].mxu0
          %455 = vdwg.mxu0
          %vm456 = vcmask 74752
          %457 = vst.msk [vmem:[#allocation3] sm:$0x3] %vm456, %v453
        $region52: #{tpu_custom_call.1} parent=43 // pred_fallthru
          _
        // Predicated region
        $region53: #{tpu_custom_call.1} parent=43 // pred_check
          %p458 = pneg %p181
        $region54: #{tpu_custom_call.1} parent=43 // pred_check_branch
          %460 = sbr.rel (%p458) target = $region56
        $region55: #{tpu_custom_call.1} parent=43 // pred_region
          %s462 = ssub.s32 32, 32
          %463 = vsyncadd [#allocation4], %s462
          %s464 = smul.addr %s22, 32
          %s465 = scalar_lea.hbm %s6, %s464
          %s467 = sshll.u32 [#allocation3], 4
          %s468 = int_to_ptr.vmem [resolvable:$true] %s467
          %470 = dma.vmem_to_hbm [thread:$0]  %s468, 32, %s465, [#allocation4]
        $region56: #{tpu_custom_call.1} parent=43 // pred_fallthru
          _
        // Predicated region
        $region57: #{tpu_custom_call.1} parent=43 // pred_check
          %p471 = pneg %p181
        $region58: #{tpu_custom_call.1} parent=43 // pred_check_branch
          %473 = sbr.rel (%p471) target = $region60
        $region59: #{tpu_custom_call.1} parent=43 // pred_region
          %474 = dma.done [#allocation4], 32
        $region60: #{tpu_custom_call.1} parent=43 // pred_fallthru
          _
      $region44: #{tpu_custom_call.1} parent=5 // pred_fallthru
        _
      %p475 = scmp.le.s32.totalorder 2, %s13
      // Predicated region
      $region61: #{tpu_custom_call.1} parent=5 // pred_check
        %p476 = pneg %p475
      $region62: #{tpu_custom_call.1} parent=5 // pred_check_branch
        %478 = sbr.rel (%p476) target = $region64
      $region63: #{tpu_custom_call.1} parent=5 // pred_region
        %s479 = ssub.s32 %s13, 2
      $region64: #{tpu_custom_call.1} parent=5 // pred_fallthru
        _
    $region6: #{tpu_custom_call.1} parent=1 // loop_footer
      %s17 = sadd.s32 1, %s13
    $region7: #{tpu_custom_call.1} parent=1 // loop_footer_branch
      %12 = sbr.rel target = $region3
    $region8: #{tpu_custom_call.1} parent=1 // loop_exit
      _
    %480 = vsyncpa [#allocation4], 1
    %s481 = scalar_lea.sflag [#allocation4], 1
    %482 = vsyncpa %s481, 1

</llo_original>
